<compile_context>
chip_gen: v6e
topology: v6e:2x2x1
jax: 0.10.0
libtpu: 0.0.40
codegen_flags: <defaults>
</compile_context>

<pallas_src>
import functools
import math

import jax
import jax.numpy as jnp
from jax import lax
from jax.experimental import pallas as pl
from jax.experimental.pallas import tpu as pltpu

LANE = 128          # TPU lane width (last-dim tile)
SUBLANE = 8         # TPU sublane width (second-to-last-dim tile)
MAX_BT = 16         # max batch elements fused per grid step (bounds unroll)
MIN_MXU_ROWS = 256  # target rows per dense matmul (fills a 256x256 MXU)


def _round_up(x, m):
    return (x + m - 1) // m * m


def _vmem_budget_bytes():
    """Generation-aware VMEM budget used both for sizing and as the Mosaic limit."""
    cap = None
    try:
        cap = getattr(pltpu.get_tpu_info(), "vmem_capacity_bytes", None)
    except Exception:
        cap = None
    if not cap:
        cap = 64 * 1024 * 1024  # conservative fallback: v7x per-TC physical VMEM
    # ~85% of physical, capped at 100 MiB (-> ~54 MiB on v7x, ~100 MiB on v5e/v6e).
    return int(min(cap * 0.85, 100 * 1024 * 1024))


def _estimate_vmem_bytes(bt, np_, fp, mp, op, adj_bytes, cd_bytes, out_bytes):
    """Rough per-grid-step VMEM footprint (double-buffered I/O + kernel temps)."""
    rows = bt * np_
    x_blk = rows * fp * cd_bytes
    adj_blk = bt * np_ * np_ * adj_bytes
    out_blk = rows * op * out_bytes
    weights = fp * mp * cd_bytes + mp * op * cd_bytes + (mp + op) * 4
    dbuf = 2 * (x_blk + adj_blk + out_blk + weights)       # 2x pipeline buffers
    tmp = (bt * np_ * np_ * cd_bytes                        # adj cast to compute dtype
           + rows * mp * (4 + cd_bytes)                     # s1 (f32) + h (compute)
           + rows * op * (4 + cd_bytes))                    # s2 / layer-2 accumulator
    return dbuf + tmp


def _choose_batch_block(b, np_, fp, mp, op, adj_bytes, cd_bytes, out_bytes, budget):
    cands = [d for d in range(1, min(b, MAX_BT) + 1) if b % d == 0]
    feas = [d for d in cands
            if _estimate_vmem_bytes(d, np_, fp, mp, op,
                                    adj_bytes, cd_bytes, out_bytes) <= 0.75 * budget]
    if not feas:
        # TODO(synk): N-tiled grid (B, N//TM, N//TK) with accumulator for huge graphs.
        raise NotImplementedError(
            "Graph too large for the full-N fused GCN kernel (N-tiling not implemented).")
    hit = [d for d in feas if d * np_ >= MIN_MXU_ROWS]
    return min(hit) if hit else max(feas)


def _gcn_fused_kernel(x_ref, adj_ref, w1_ref, b1_ref, w2_ref, b2_ref, out_ref,
                      *, bt, n_pad, compute_dtype):
    # x_ref   : (bt*n_pad, Fp)      compute_dtype  (batch rows flattened)
    # adj_ref : (bt, n_pad, n_pad)  raw adjacency dtype (cast in-kernel)
    # w1_ref  : (Fp, Mp) compute_dtype ; b1_ref : (1, Mp) f32
    # w2_ref  : (Mp, Op) compute_dtype ; b2_ref : (1, Op) f32
    # out_ref : (bt, n_pad, Op)     out dtype
    cd = compute_dtype

    # adj is read from HBM once per block and cast once; reused by both layers.
    adj_cd = [adj_ref[b].astype(cd) for b in range(bt)]      # bt x (n_pad, n_pad)

    # ---- layer 1 dense part: S1 = X @ W1 over all bt*n_pad rows at once ----
    s1 = jnp.dot(x_ref[...], w1_ref[...],
                 preferred_element_type=jnp.float32)          # (bt*n_pad, Mp) f32
    s1 = s1.astype(cd)

    # ---- layer 1 adj part: h = relu(adj^T @ S1 + b1), per batch element ----
    h_parts = []
    for b in range(bt):                                       # static unroll (bt <= 16)
        s1_b = s1[b * n_pad:(b + 1) * n_pad]                  # (n_pad, Mp)
        # adj_b^T @ s1_b without materializing the transpose.
        hb = lax.dot_general(adj_cd[b], s1_b, (((0,), (0,)), ((), ())),
                             preferred_element_type=jnp.float32)
        hb = jnp.maximum(hb + b1_ref[...], 0.0)               # bias + ReLU in f32
        h_parts.append(hb.astype(cd))
    h = jnp.concatenate(h_parts, axis=0)                      # (bt*n_pad, Mp)

    # ---- layer 2 dense part: S2 = H @ W2 over all rows at once ----
    s2 = jnp.dot(h, w2_ref[...],
                 preferred_element_type=jnp.float32).astype(cd)

    # ---- layer 2 adj part: out = adj^T @ S2 + b2 ----
    for b in range(bt):
        ob = lax.dot_general(adj_cd[b], s2[b * n_pad:(b + 1) * n_pad],
                             (((0,), (0,)), ((), ())),
                             preferred_element_type=jnp.float32)
        out_ref[b] = (ob + b2_ref[...]).astype(out_ref.dtype)


def gcn_forward(x, adj, params, *, compute_dtype=jnp.bfloat16, out_dtype=jnp.float32):
    """Fused 2-layer GCN forward. x: [B,N,F], adj: [B,N,N]."""
    (w1, b1), (w2, b2) = params
    B, N, F = x.shape
    assert adj.shape == (B, N, N)
    M = w1.shape[1]
    O = w2.shape[1]
    assert w1.shape[0] == F and w2.shape[0] == M

    # Pad feature dims to lane width, node dim to sublane width (zeros are neutral).
    Fp = _round_up(F, LANE)
    Mp = _round_up(M, LANE)
    Op = _round_up(O, LANE)
    Np = _round_up(N, SUBLANE)

    x_p = jnp.pad(x, ((0, 0), (0, Np - N), (0, Fp - F))).astype(compute_dtype)
    x_p = x_p.reshape(B * Np, Fp)                 # rows flattened for dense MXU matmuls
    if Np != N:
        # TODO(synk): this pad costs one extra HBM pass over adj; only when N % 8 != 0.
        adj_in = jnp.pad(adj, ((0, 0), (0, Np - N), (0, Np - N)))
    else:
        adj_in = adj                              # untouched: read once, cast in-kernel
    w1_p = jnp.pad(w1, ((0, Fp - F), (0, Mp - M))).astype(compute_dtype)
    w2_p = jnp.pad(w2, ((0, Mp - M), (0, Op - O))).astype(compute_dtype)
    b1_p = jnp.pad(b1, (0, Mp - M)).reshape(1, Mp).astype(jnp.float32)
    b2_p = jnp.pad(b2, (0, Op - O)).reshape(1, Op).astype(jnp.float32)

    adj_bytes = jnp.dtype(adj_in.dtype).itemsize
    cd_bytes = jnp.dtype(compute_dtype).itemsize
    out_bytes = jnp.dtype(out_dtype).itemsize

    budget = _vmem_budget_bytes()
    bt = _choose_batch_block(B, Np, Fp, Mp, Op, adj_bytes, cd_bytes, out_bytes, budget)

    kernel = functools.partial(_gcn_fused_kernel, bt=bt, n_pad=Np,
                               compute_dtype=compute_dtype)

    out_p = pl.pallas_call(
        kernel,
        out_shape=jax.ShapeDtypeStruct((B, Np, Op), out_dtype),
        grid_spec=pltpu.PrefetchScalarGridSpec(
            num_scalar_prefetch=0,
            grid=(B // bt,),
            in_specs=[
                pl.BlockSpec((bt * Np, Fp), lambda i: (i, 0)),      # x (rows flattened)
                pl.BlockSpec((bt, Np, Np), lambda i: (i, 0, 0)),    # adj (raw, no T)
                pl.BlockSpec((Fp, Mp), lambda i: (0, 0)),           # W1
                pl.BlockSpec((1, Mp), lambda i: (0, 0)),            # b1
                pl.BlockSpec((Mp, Op), lambda i: (0, 0)),           # W2
                pl.BlockSpec((1, Op), lambda i: (0, 0)),            # b2
            ],
            out_specs=pl.BlockSpec((bt, Np, Op), lambda i: (i, 0, 0)),
        ),
        compiler_params=pltpu.CompilerParams(
            dimension_semantics=("parallel",),    # megacore splits batch blocks (v7x)
            vmem_limit_bytes=budget,
        ),
    )(x_p, adj_in, w1_p, b1_p, w2_p, b2_p)

    if Np != N or Op != O:
        # Cheap for padded demo shapes; consumers that accept padded Op can skip this.
        out_p = out_p[:, :N, :O]
    return out_p


def init_gc_params(key, in_features, out_features):
    """Matches GraphConvolution.reset_parameters: U(-stdv, stdv), stdv = 1/sqrt(out)."""
    stdv = 1.0 / math.sqrt(out_features)
    kw, kb = jax.random.split(key)
    w = jax.random.uniform(kw, (in_features, out_features), jnp.float32, -stdv, stdv)
    b = jax.random.uniform(kb, (out_features,), jnp.float32, -stdv, stdv)
    return w, b


def gcn_forward_ref_f32(x, adj, params):
    """Pure-JAX f32 reference mirroring the PyTorch einsums."""
    (w1, b1), (w2, b2) = params
    s = jnp.einsum("bni,io->bno", x, w1)
    h = jnp.maximum(jnp.einsum("bnm,bno->bmo", adj, s) + b1, 0.0)
    s = jnp.einsum("bni,io->bno", h, w2)
    return jnp.einsum("bnm,bno->bmo", adj, s) + b2


def gcn_forward_ref_mixed(x, adj, params, compute_dtype=jnp.bfloat16):
    """Pure-JAX reference mirroring the kernel's mixed precision exactly
    (bf16 matmul operands, f32 accumulation, f32 bias/ReLU)."""
    (w1, b1), (w2, b2) = params
    cd = compute_dtype
    x_c, adj_c = x.astype(cd), adj.astype(cd)
    w1_c, w2_c = w1.astype(cd), w2.astype(cd)
    s = jnp.einsum("bni,io->bno", x_c, w1_c, preferred_element_type=jnp.float32)
    h = jnp.einsum("bnm,bno->bmo", adj_c, s.astype(cd),
                   preferred_element_type=jnp.float32) + b1
    h = jnp.maximum(h, 0.0).astype(cd)
    s = jnp.einsum("bni,io->bno", h, w2_c, preferred_element_type=jnp.float32)
    return jnp.einsum("bnm,bno->bmo", adj_c, s.astype(cd),
                      preferred_element_type=jnp.float32) + b2


if __name__ == "__main__":
    # Small shapes: batch=2, nodes=8, nfeat=16, nmid=32, nout=16
    B, N = 2, 8
    NFEAT, NMID, NOUT = 16, 32, 16

    key = jax.random.PRNGKey(0)
    kx, kadj, k1, k2 = jax.random.split(key, 4)

    x = jax.random.normal(kx, (B, N, NFEAT), dtype=jnp.float32)
    adj = jax.random.uniform(kadj, (B, N, N), dtype=jnp.float32)

    params = (
        init_gc_params(k1, NFEAT, NMID),
        init_gc_params(k2, NMID, NOUT),
    )

    out = jax.block_until_ready(gcn_forward(x, adj, params))
    assert out.shape == (B, N, NOUT)

    # Tight check against a reference that mirrors the kernel's mixed precision.
    ref_mixed = gcn_forward_ref_mixed(x, adj, params)
    assert jnp.allclose(out, ref_mixed, atol=5e-3, rtol=5e-3), \
        "mismatch vs mixed-precision reference"

    # Loose sanity check against the full-f32 reference (bf16 operand rounding).
    ref_f32 = gcn_forward_ref_f32(x, adj, params)
    assert jnp.allclose(out, ref_f32, atol=0.5, rtol=0.1), "mismatch vs f32 reference"

    print("KERNEL_OK")
</pallas_src>

<mosaic_0001>
module attributes {stable_mosaic.version = 11 : i64} {
  func.func @_gcn_fused_kernel(%arg0: i32, %arg1: memref<16x128xbf16, #tpu.memory_space<vmem>>, %arg2: memref<2x8x8xf32, #tpu.memory_space<vmem>>, %arg3: memref<128x128xbf16, #tpu.memory_space<vmem>>, %arg4: memref<1x128xf32, #tpu.memory_space<vmem>>, %arg5: memref<128x128xbf16, #tpu.memory_space<vmem>>, %arg6: memref<1x128xf32, #tpu.memory_space<vmem>>, %arg7: memref<2x8x128xf32, #tpu.memory_space<vmem>>) attributes {dimension_semantics = [#tpu.dimension_semantics<parallel>], iteration_bounds = array<i64: 1>, scalar_prefetch = 0 : i64, scratch_operands = 0 : i64, tpu.core_type = #tpu.core_type<tc>, window_params = [{transform_indices = @transform_0, window_bounds = array<i64: 16, 128>}, {transform_indices = @transform_1, window_bounds = array<i64: 2, 8, 8>}, {pipeline_mode = #tpu.pipeline_mode<synchronous>, transform_indices = @transform_2, window_bounds = array<i64: 128, 128>}, {pipeline_mode = #tpu.pipeline_mode<synchronous>, transform_indices = @transform_3, window_bounds = array<i64: 1, 128>}, {pipeline_mode = #tpu.pipeline_mode<synchronous>, transform_indices = @transform_4, window_bounds = array<i64: 128, 128>}, {pipeline_mode = #tpu.pipeline_mode<synchronous>, transform_indices = @transform_5, window_bounds = array<i64: 1, 128>}, {transform_indices = @transform_6, window_bounds = array<i64: 2, 8, 128>}]} {
    %c0 = arith.constant 0 : index
    %c0_0 = arith.constant 0 : index
    %c0_1 = arith.constant 0 : index
    %0 = vector.load %arg2[%c0, %c0_0, %c0_1] : memref<2x8x8xf32, #tpu.memory_space<vmem>>, vector<1x8x8xf32>
    %1 = vector.shape_cast %0 : vector<1x8x8xf32> to vector<8x8xf32>
    %2 = arith.truncf %1 : vector<8x8xf32> to vector<8x8xbf16>
    %c1 = arith.constant 1 : index
    %c0_2 = arith.constant 0 : index
    %c0_3 = arith.constant 0 : index
    %3 = vector.load %arg2[%c1, %c0_2, %c0_3] : memref<2x8x8xf32, #tpu.memory_space<vmem>>, vector<1x8x8xf32>
    %4 = vector.shape_cast %3 : vector<1x8x8xf32> to vector<8x8xf32>
    %5 = arith.truncf %4 : vector<8x8xf32> to vector<8x8xbf16>
    %c0_4 = arith.constant 0 : index
    %c0_5 = arith.constant 0 : index
    %6 = vector.load %arg1[%c0_4, %c0_5] : memref<16x128xbf16, #tpu.memory_space<vmem>>, vector<16x128xbf16>
    %c0_6 = arith.constant 0 : index
    %c0_7 = arith.constant 0 : index
    %7 = vector.load %arg3[%c0_6, %c0_7] : memref<128x128xbf16, #tpu.memory_space<vmem>>, vector<128x128xbf16>
    %cst = arith.constant dense<0.000000e+00> : vector<16x128xf32>
    %8 = tpu.matmul %6, %7, %cst {dimension_numbers = #tpu.dot_dimension_numbers<[1], [0], [0], [1], [0, 0, 1, 1], [], []>} : vector<16x128xbf16>, vector<128x128xbf16>, vector<16x128xf32> -> vector<16x128xf32>
    %9 = arith.truncf %8 : vector<16x128xf32> to vector<16x128xbf16>
    %10 = vector.extract_strided_slice %9 {offsets = [0, 0], sizes = [8, 128], strides = [1, 1]} : vector<16x128xbf16> to vector<8x128xbf16>
    %cst_8 = arith.constant dense<0.000000e+00> : vector<8x128xf32>
    %11 = tpu.matmul %2, %10, %cst_8 {dimension_numbers = #tpu.dot_dimension_numbers<[0], [0], [1], [1], [0, 1, 1, 1], [], []>} : vector<8x8xbf16>, vector<8x128xbf16>, vector<8x128xf32> -> vector<8x128xf32>
    %c0_9 = arith.constant 0 : index
    %c0_10 = arith.constant 0 : index
    %12 = vector.load %arg4[%c0_9, %c0_10] : memref<1x128xf32, #tpu.memory_space<vmem>>, vector<1x128xf32>
    %13 = vector.broadcast %12 : vector<1x128xf32> to vector<8x128xf32>
    %14 = arith.addf %11, %13 : vector<8x128xf32>
    %cst_11 = arith.constant 0.000000e+00 : f32
    %15 = vector.broadcast %cst_11 : f32 to vector<8x128xf32>
    %16 = arith.maximumf %14, %15 : vector<8x128xf32>
    %17 = arith.truncf %16 : vector<8x128xf32> to vector<8x128xbf16>
    %18 = vector.extract_strided_slice %9 {offsets = [8, 0], sizes = [8, 128], strides = [1, 1]} : vector<16x128xbf16> to vector<8x128xbf16>
    %cst_12 = arith.constant dense<0.000000e+00> : vector<8x128xf32>
    %19 = tpu.matmul %5, %18, %cst_12 {dimension_numbers = #tpu.dot_dimension_numbers<[0], [0], [1], [1], [0, 1, 1, 1], [], []>} : vector<8x8xbf16>, vector<8x128xbf16>, vector<8x128xf32> -> vector<8x128xf32>
    %c0_13 = arith.constant 0 : index
    %c0_14 = arith.constant 0 : index
    %20 = vector.load %arg4[%c0_13, %c0_14] : memref<1x128xf32, #tpu.memory_space<vmem>>, vector<1x128xf32>
    %21 = vector.broadcast %20 : vector<1x128xf32> to vector<8x128xf32>
    %22 = arith.addf %19, %21 : vector<8x128xf32>
    %cst_15 = arith.constant 0.000000e+00 : f32
    %23 = vector.broadcast %cst_15 : f32 to vector<8x128xf32>
    %24 = arith.maximumf %22, %23 : vector<8x128xf32>
    %25 = arith.truncf %24 : vector<8x128xf32> to vector<8x128xbf16>
    %26 = tpu.concatenate %17, %25 in 0 : vector<8x128xbf16>, vector<8x128xbf16> -> vector<16x128xbf16>
    %c0_16 = arith.constant 0 : index
    %c0_17 = arith.constant 0 : index
    %27 = vector.load %arg5[%c0_16, %c0_17] : memref<128x128xbf16, #tpu.memory_space<vmem>>, vector<128x128xbf16>
    %cst_18 = arith.constant dense<0.000000e+00> : vector<16x128xf32>
    %28 = tpu.matmul %26, %27, %cst_18 {dimension_numbers = #tpu.dot_dimension_numbers<[1], [0], [0], [1], [0, 0, 1, 1], [], []>} : vector<16x128xbf16>, vector<128x128xbf16>, vector<16x128xf32> -> vector<16x128xf32>
    %29 = arith.truncf %28 : vector<16x128xf32> to vector<16x128xbf16>
    %30 = vector.extract_strided_slice %29 {offsets = [0, 0], sizes = [8, 128], strides = [1, 1]} : vector<16x128xbf16> to vector<8x128xbf16>
    %cst_19 = arith.constant dense<0.000000e+00> : vector<8x128xf32>
    %31 = tpu.matmul %2, %30, %cst_19 {dimension_numbers = #tpu.dot_dimension_numbers<[0], [0], [1], [1], [0, 1, 1, 1], [], []>} : vector<8x8xbf16>, vector<8x128xbf16>, vector<8x128xf32> -> vector<8x128xf32>
    %c0_20 = arith.constant 0 : index
    %c0_21 = arith.constant 0 : index
    %32 = vector.load %arg6[%c0_20, %c0_21] : memref<1x128xf32, #tpu.memory_space<vmem>>, vector<1x128xf32>
    %33 = vector.broadcast %32 : vector<1x128xf32> to vector<8x128xf32>
    %34 = arith.addf %31, %33 : vector<8x128xf32>
    %c0_22 = arith.constant 0 : index
    %c0_23 = arith.constant 0 : index
    %c0_24 = arith.constant 0 : index
    %35 = vector.load %arg7[%c0_22, %c0_23, %c0_24] : memref<2x8x128xf32, #tpu.memory_space<vmem>>, vector<1x8x128xf32>
    %36 = vector.shape_cast %35 : vector<1x8x128xf32> to vector<8x128xf32>
    %37 = vector.shape_cast %34 : vector<8x128xf32> to vector<1x8x128xf32>
    tpu.vector_store %arg7[%c0_22, %c0_23, %c0_24], %37 {strides = array<i32>} : memref<2x8x128xf32, #tpu.memory_space<vmem>>, vector<1x8x128xf32>,
    %38 = vector.extract_strided_slice %29 {offsets = [8, 0], sizes = [8, 128], strides = [1, 1]} : vector<16x128xbf16> to vector<8x128xbf16>
    %cst_25 = arith.constant dense<0.000000e+00> : vector<8x128xf32>
    %39 = tpu.matmul %5, %38, %cst_25 {dimension_numbers = #tpu.dot_dimension_numbers<[0], [0], [1], [1], [0, 1, 1, 1], [], []>} : vector<8x8xbf16>, vector<8x128xbf16>, vector<8x128xf32> -> vector<8x128xf32>
    %c0_26 = arith.constant 0 : index
    %c0_27 = arith.constant 0 : index
    %40 = vector.load %arg6[%c0_26, %c0_27] : memref<1x128xf32, #tpu.memory_space<vmem>>, vector<1x128xf32>
    %41 = vector.broadcast %40 : vector<1x128xf32> to vector<8x128xf32>
    %42 = arith.addf %39, %41 : vector<8x128xf32>
    %c1_28 = arith.constant 1 : index
    %c0_29 = arith.constant 0 : index
    %c0_30 = arith.constant 0 : index
    %43 = vector.load %arg7[%c1_28, %c0_29, %c0_30] : memref<2x8x128xf32, #tpu.memory_space<vmem>>, vector<1x8x128xf32>
    %44 = vector.shape_cast %43 : vector<1x8x128xf32> to vector<8x128xf32>
    %45 = vector.shape_cast %42 : vector<8x128xf32> to vector<1x8x128xf32>
    tpu.vector_store %arg7[%c1_28, %c0_29, %c0_30], %45 {strides = array<i32>} : memref<2x8x128xf32, #tpu.memory_space<vmem>>, vector<1x8x128xf32>,
    return
  }
  func.func @transform_0(%arg0: i32) -> (i32, i32) {
    %c0_i32 = arith.constant 0 : i32
    %c0_i32_0 = arith.constant 0 : i32
    return %arg0, %c0_i32 : i32, i32
  }
  func.func @transform_1(%arg0: i32) -> (i32, i32, i32) {
    %c0_i32 = arith.constant 0 : i32
    %c0_i32_0 = arith.constant 0 : i32
    %c0_i32_1 = arith.constant 0 : i32
    return %arg0, %c0_i32, %c0_i32_0 : i32, i32, i32
  }
  func.func @transform_2(%arg0: i32) -> (i32, i32) {
    %c0_i32 = arith.constant 0 : i32
    %c0_i32_0 = arith.constant 0 : i32
    %c0_i32_1 = arith.constant 0 : i32
    return %c0_i32, %c0_i32_0 : i32, i32
  }
  func.func @transform_3(%arg0: i32) -> (i32, i32) {
    %c0_i32 = arith.constant 0 : i32
    %c0_i32_0 = arith.constant 0 : i32
    %c0_i32_1 = arith.constant 0 : i32
    return %c0_i32, %c0_i32_0 : i32, i32
  }
  func.func @transform_4(%arg0: i32) -> (i32, i32) {
    %c0_i32 = arith.constant 0 : i32
    %c0_i32_0 = arith.constant 0 : i32
    %c0_i32_1 = arith.constant 0 : i32
    return %c0_i32, %c0_i32_0 : i32, i32
  }
  func.func @transform_5(%arg0: i32) -> (i32, i32) {
    %c0_i32 = arith.constant 0 : i32
    %c0_i32_0 = arith.constant 0 : i32
    %c0_i32_1 = arith.constant 0 : i32
    return %c0_i32, %c0_i32_0 : i32, i32
  }
  func.func @transform_6(%arg0: i32) -> (i32, i32, i32) {
    %c0_i32 = arith.constant 0 : i32
    %c0_i32_0 = arith.constant 0 : i32
    %c0_i32_1 = arith.constant 0 : i32
    return %arg0, %c0_i32, %c0_i32_0 : i32, i32, i32
  }
}

</mosaic_0001>

<llo_original>
// kernel: tpu_custom_call.1
$region0: #{tpu_custom_call.1}
  #allocation0 [shape = 'u32[]', space=smem, size = 0x4, offset = 0x4, fixed_abs, tag = 'smem constant byte address 0x4 - core index']
  #allocation1 [shape = 'u32[144,128]{1,0:T(1,128)}', space=vmem, size = 0x12000, scoped, tag = 'internal scratch']
  %s0 = inlined_call_operand.hbm [shape: bf16[16,128], index: 0, kind: input, shape index: {}]
  %s1 = inlined_call_operand.hbm [shape: f32[2,8,8], index: 1, kind: input, shape index: {}]
  %s2 = inlined_call_operand.hbm [shape: bf16[128,128], index: 2, kind: input, shape index: {}]
  %s3 = inlined_call_operand.vmem [shape: f32[1,128], index: 3, kind: input, shape index: {}]
  %s4 = inlined_call_operand.hbm [shape: bf16[128,128], index: 4, kind: input, shape index: {}]
  %s5 = inlined_call_operand.vmem [shape: f32[1,128], index: 5, kind: input, shape index: {}]
  %s6 = inlined_call_operand.hbm [shape: f32[2,8,128], index: 6, kind: output, shape index: {}]
  %s7 = sld [smem:[#allocation0]]
  $region50: #{tpu_custom_call.1} parent=0
    _
  %s9 = ssub.s32 1, %s7
  %s10 = scalar_select 0, %s9, %s7
  $region1: #{tpu_custom_call.1} parent=0
    #allocation2 [shape = 'u8[4096]{0}', space=vmem, size = 0x1000, scoped, tag = 'input window, operand 0, single buffered']
    #allocation3 [shape = 's32[1]{0}', space=sflag, size = 0x4, scoped, tag = 'scoped memory for tpu_custom_call.1']
    #allocation4 [shape = 's32[1]{0}', space=sflag, size = 0x4, scoped, tag = 'scoped memory for tpu_custom_call.1']
    #allocation5 [shape = 'u8[8192]{0}', space=vmem, size = 0x2000, scoped, tag = 'input window, operand 1, single buffered']
    #allocation6 [shape = 's32[1]{0}', space=sflag, size = 0x4, scoped, tag = 'scoped memory for tpu_custom_call.1']
    #allocation7 [shape = 'u8[32768]{0}', space=vmem, size = 0x8000, scoped, tag = 'input window, operand 2, single buffered']
    #allocation8 [shape = 'u8[32768]{0}', space=vmem, size = 0x8000, scoped, tag = 'input window, operand 4, single buffered']
    #allocation9 [shape = 's32[1]{0}', space=sflag, size = 0x4, scoped, tag = 'scoped memory for tpu_custom_call.1']
    #allocation10 [shape = 'u8[8192]{0}', space=vmem, size = 0x2000, scoped, tag = 'output window, operand 0, single buffered']
    %11 = vsyncpa [#allocation3], 0
    %12 = vsyncpa [#allocation6], 0
    %13 = vsyncpa [#allocation9], 0
    %14 = vsyncpa [#allocation4], 0
    // Predicated region
    $region2: #{tpu_custom_call.1} parent=1 // pred_check
      _
    $region3: #{tpu_custom_call.1} parent=1 // pred_check_branch
      %16 = sbr.rel (0) target = $region5
    $region4: #{tpu_custom_call.1} parent=1 // pred_region
      %s18 = ssub.s32 128, 128
      %19 = vsyncadd [#allocation3], %s18
      %s20 = sshll.u32 [#allocation2], 4
      %s21 = int_to_ptr.vmem [resolvable:$true] %s20
      %26 = dma.hbm_to_vmem [thread:$0]  %s0, 128, %s21, [#allocation3], 64, 64, 4
    $region5: #{tpu_custom_call.1} parent=1 // pred_fallthru
      _
    // Predicated region
    $region6: #{tpu_custom_call.1} parent=1 // pred_check
      _
    $region7: #{tpu_custom_call.1} parent=1 // pred_check_branch
      %28 = sbr.rel (0) target = $region9
    $region8: #{tpu_custom_call.1} parent=1 // pred_region
      %s30 = ssub.s32 256, 256
      %31 = vsyncadd [#allocation6], %s30
      %s32 = sshll.u32 [#allocation5], 4
      %s33 = int_to_ptr.vmem [resolvable:$true] %s32
      %38 = dma.hbm_to_vmem [thread:$0]  %s1, 256, %s33, [#allocation6], 128, 128, 8
    $region9: #{tpu_custom_call.1} parent=1 // pred_fallthru
      _
    // Predicated region
    $region10: #{tpu_custom_call.1} parent=1 // pred_check
      _
    $region11: #{tpu_custom_call.1} parent=1 // pred_check_branch
      %40 = sbr.rel (0) target = $region13
    $region12: #{tpu_custom_call.1} parent=1 // pred_region
      %s42 = ssub.s32 1024, 1024
      %43 = vsyncadd [#allocation6], %s42
      %s44 = sshll.u32 [#allocation7], 4
      %s45 = int_to_ptr.vmem [resolvable:$true] %s44
      %50 = dma.hbm_to_vmem [thread:$0]  %s2, 1024, %s45, [#allocation6], 64, 64, 4
    $region13: #{tpu_custom_call.1} parent=1 // pred_fallthru
      _
    // Predicated region
    $region14: #{tpu_custom_call.1} parent=1 // pred_check
      _
    $region15: #{tpu_custom_call.1} parent=1 // pred_check_branch
      %52 = sbr.rel (0) target = $region17
    $region16: #{tpu_custom_call.1} parent=1 // pred_region
      _
    $region17: #{tpu_custom_call.1} parent=1 // pred_fallthru
      _
    // Predicated region
    $region18: #{tpu_custom_call.1} parent=1 // pred_check
      _
    $region19: #{tpu_custom_call.1} parent=1 // pred_check_branch
      %54 = sbr.rel (0) target = $region21
    $region20: #{tpu_custom_call.1} parent=1 // pred_region
      %s56 = ssub.s32 1024, 1024
      %57 = vsyncadd [#allocation9], %s56
      %s58 = sshll.u32 [#allocation8], 4
      %s59 = int_to_ptr.vmem [resolvable:$true] %s58
      %64 = dma.hbm_to_vmem [thread:$0]  %s4, 1024, %s59, [#allocation9], 64, 64, 4
    $region21: #{tpu_custom_call.1} parent=1 // pred_fallthru
      _
    // Predicated region
    $region22: #{tpu_custom_call.1} parent=1 // pred_check
      _
    $region23: #{tpu_custom_call.1} parent=1 // pred_check_branch
      %66 = sbr.rel (0) target = $region25
    $region24: #{tpu_custom_call.1} parent=1 // pred_region
      _
    $region25: #{tpu_custom_call.1} parent=1 // pred_fallthru
      _
    // Predicated region
    $region26: #{tpu_custom_call.1} parent=1 // pred_check
      _
    $region27: #{tpu_custom_call.1} parent=1 // pred_check_branch
      %68 = sbr.rel (0) target = $region29
    $region28: #{tpu_custom_call.1} parent=1 // pred_region
      %69 = dma.done [#allocation3], 128
    $region29: #{tpu_custom_call.1} parent=1 // pred_fallthru
      _
    // Predicated region
    $region30: #{tpu_custom_call.1} parent=1 // pred_check
      _
    $region31: #{tpu_custom_call.1} parent=1 // pred_check_branch
      %71 = sbr.rel (0) target = $region33
    $region32: #{tpu_custom_call.1} parent=1 // pred_region
      %72 = dma.done [#allocation6], 256
    $region33: #{tpu_custom_call.1} parent=1 // pred_fallthru
      _
    // Predicated region
    $region34: #{tpu_custom_call.1} parent=1 // pred_check
      _
    $region35: #{tpu_custom_call.1} parent=1 // pred_check_branch
      %74 = sbr.rel (0) target = $region37
    $region36: #{tpu_custom_call.1} parent=1 // pred_region
      %75 = dma.done [#allocation6], 1024
    $region37: #{tpu_custom_call.1} parent=1 // pred_fallthru
      _
    // Predicated region
    $region38: #{tpu_custom_call.1} parent=1 // pred_check
      _
    $region39: #{tpu_custom_call.1} parent=1 // pred_check_branch
      %77 = sbr.rel (0) target = $region41
    $region40: #{tpu_custom_call.1} parent=1 // pred_region
      %78 = dma.done [#allocation9], 1024
    $region41: #{tpu_custom_call.1} parent=1 // pred_fallthru
      _
    %v80 = vld [vmem:[#allocation5] sm:$0xff]
    %v81 = vpack.c.bf16 %v80, %v80
    %s82 = scalar_lea.vmem [#allocation5], 8
    %v83 = vld [vmem:[%s82] sm:$0xff]
    %v84 = vpack.c.bf16 %v83, %v83
    %v85 = vld [vmem:[#allocation2] sm:$0xf]
    %v86 = vld [vmem:[#allocation2 + $0x4] sm:$0xf]
    %v87 = vld [vmem:[#allocation7] sm:$0xf]
    %v88 = vld [vmem:[#allocation7 + $0x4] sm:$0xf]
    %v89 = vld [vmem:[#allocation7 + $0x8] sm:$0xf]
    %v90 = vld [vmem:[#allocation7 + $0xc] sm:$0xf]
    %v91 = vld [vmem:[#allocation7 + $0x10] sm:$0xf]
    %v92 = vld [vmem:[#allocation7 + $0x14] sm:$0xf]
    %v93 = vld [vmem:[#allocation7 + $0x18] sm:$0xf]
    %v94 = vld [vmem:[#allocation7 + $0x1c] sm:$0xf]
    %v95 = vld [vmem:[#allocation7 + $0x20] sm:$0xf]
    %v96 = vld [vmem:[#allocation7 + $0x24] sm:$0xf]
    %v97 = vld [vmem:[#allocation7 + $0x28] sm:$0xf]
    %v98 = vld [vmem:[#allocation7 + $0x2c] sm:$0xf]
    %v99 = vld [vmem:[#allocation7 + $0x30] sm:$0xf]
    %v100 = vld [vmem:[#allocation7 + $0x34] sm:$0xf]
    %v101 = vld [vmem:[#allocation7 + $0x38] sm:$0xf]
    %v102 = vld [vmem:[#allocation7 + $0x3c] sm:$0xf]
    %v105 = vunpack.c.l.b16 %v85
    %v106 = vunpack.c.l.b16 %v86
    %v107 = vpack.c.b16 %v106, %v105
    %v125 = vunpack.c.l.b16 %v87
    %v126 = vunpack.c.l.b16 %v88
    %v127 = vunpack.c.l.b16 %v89
    %v128 = vunpack.c.l.b16 %v90
    %v129 = vunpack.c.l.b16 %v91
    %v130 = vunpack.c.l.b16 %v92
    %v131 = vunpack.c.l.b16 %v93
    %v132 = vunpack.c.l.b16 %v94
    %v133 = vunpack.c.l.b16 %v95
    %v134 = vunpack.c.l.b16 %v96
    %v135 = vunpack.c.l.b16 %v97
    %v136 = vunpack.c.l.b16 %v98
    %v137 = vunpack.c.l.b16 %v99
    %v138 = vunpack.c.l.b16 %v100
    %v139 = vunpack.c.l.b16 %v101
    %v140 = vunpack.c.l.b16 %v102
    %v141 = vpack.c.b16 %v126, %v125
    %v142 = vpack.c.b16 %v128, %v127
    %v143 = vpack.c.b16 %v130, %v129
    %v144 = vpack.c.b16 %v132, %v131
    %v145 = vpack.c.b16 %v134, %v133
    %v146 = vpack.c.b16 %v136, %v135
    %v147 = vpack.c.b16 %v138, %v137
    %v148 = vpack.c.b16 %v140, %v139
    %157 = vmatprep.subr.bf16.mxu0 0
    %158 = vmatpush1.bf16.msra.mxu0 %v148
    %159 = vmatprep.subr.bf16.mxu0 0
    %160 = vmatpush1.bf16.msra.mxu0 %v147
    %161 = vmatprep.subr.bf16.mxu0 0
    %162 = vmatpush1.bf16.msra.mxu0 %v146
    %163 = vmatprep.subr.bf16.mxu0 0
    %164 = vmatpush1.bf16.msra.mxu0 %v145
    %165 = vmatprep.subr.bf16.mxu0 0
    %166 = vmatpush1.bf16.msra.mxu0 %v144
    %167 = vmatprep.subr.bf16.mxu0 0
    %168 = vmatpush1.bf16.msra.mxu0 %v143
    %169 = vmatprep.subr.bf16.mxu0 0
    %170 = vmatpush1.bf16.msra.mxu0 %v142
    %171 = vmatprep.subr.bf16.mxu0 0
    %172 = vmatpush1.bf16.msra.mxu0 %v141
    %173 = vmatprep.subr.bf16.mxu0 0
    %174 = vmatpush2.bf16.msra.mxu0 0
    %175 = vmatprep.subr.bf16.mxu0 0
    %176 = vmatpush2.bf16.msra.mxu0 0
    %177 = vmatprep.subr.bf16.mxu0 0
    %178 = vmatpush2.bf16.msra.mxu0 0
    %179 = vmatprep.subr.bf16.mxu0 0
    %180 = vmatpush2.bf16.msra.mxu0 0
    %181 = vmatprep.subr.bf16.mxu0 0
    %182 = vmatpush2.bf16.msra.mxu0 0
    %183 = vmatprep.subr.bf16.mxu0 0
    %184 = vmatpush2.bf16.msra.mxu0 0
    %185 = vmatprep.subr.bf16.mxu0 0
    %186 = vmatpush2.bf16.msra.mxu0 0
    %187 = vmatprep.subr.bf16.mxu0 0
    %188 = vmatpush2.bf16.msra.mxu0 0
    %189 = vmatprep.mubr.bf16.mxu0 0
    %190 = vmatmul.mubr.bf16.gmra.mxu0 %v107
    %v191 = vpop.f32.mrf.mxu0
    %v192 = vadd.f32 0.0, %v191
    %v193 = vpop.f32.mrf.mxu0
    %v194 = vpop.f32.mrf.mxu0
    %v195 = vadd.f32 0.0, %v194
    %v196 = vpop.f32.mrf.mxu0
    %197 = vdwg.mxu0
    %v198 = vpack.c.bf16 %v195, %v192
    %v199 = vld [vmem:[%s3] sm:$0x1]
    %v201 = vlaneseq
    %v202 = vshrl.u32 %v201, 7
    %v203 = vsub.s32 0, %v202
    %v204 = vrot.slane %v199, %v203
    %206 = vxpose.xlu0.c.b16.start [1/8] %v81, 128
    %207 = vxpose.xlu0.c.b16.cont [2/8] 0, 128
    %208 = vxpose.xlu0.c.b16.cont [3/8] 0, 128
    %209 = vxpose.xlu0.c.b16.cont [4/8] 0, 128
    %210 = vxpose.xlu0.c.b16.cont [5/8] 0, 128
    %211 = vxpose.xlu0.c.b16.cont [6/8] 0, 128
    %212 = vxpose.xlu0.c.b16.cont [7/8] 0, 128
    %213 = vxpose.xlu0.c.b16.end [8/8] 0, 128
    %v214 = vpop.trf.xlu0
    %v215 = vpop.trf.xlu0
    %v216 = vpop.trf.xlu0
    %v217 = vpop.trf.xlu0
    %v218 = vpop.trf.xlu0
    %v219 = vpop.trf.xlu0
    %v220 = vpop.trf.xlu0
    %v221 = vpop.trf.xlu0
    %vm222 = vcmask 64512
    %v224 = vsel %vm222, %v214, 0
    %vm226 = vcmask 1043456
    %v228 = vsel %vm226, %v198, 0
    %230 = vmatprep.subr.bf16.mxu0 0
    %231 = vmatpush1.bf16.msra.mxu0 0
    %232 = vmatprep.subr.bf16.mxu0 0
    %233 = vmatpush1.bf16.msra.mxu0 0
    %234 = vmatprep.subr.bf16.mxu0 0
    %235 = vmatpush1.bf16.msra.mxu0 0
    %236 = vmatprep.subr.bf16.mxu0 0
    %237 = vmatpush1.bf16.msra.mxu0 0
    %238 = vmatprep.subr.bf16.mxu0 0
    %239 = vmatpush1.bf16.msra.mxu0 0
    %240 = vmatprep.subr.bf16.mxu0 0
    %241 = vmatpush1.bf16.msra.mxu0 0
    %242 = vmatprep.subr.bf16.mxu0 0
    %243 = vmatpush1.bf16.msra.mxu0 0
    %244 = vmatprep.subr.bf16.mxu0 0
    %245 = vmatpush1.bf16.msra.mxu0 %v228
    %246 = vmatprep.subr.bf16.mxu0 0
    %247 = vmatpush2.bf16.msra.mxu0 0
    %248 = vmatprep.subr.bf16.mxu0 0
    %249 = vmatpush2.bf16.msra.mxu0 0
    %250 = vmatprep.subr.bf16.mxu0 0
    %251 = vmatpush2.bf16.msra.mxu0 0
    %252 = vmatprep.subr.bf16.mxu0 0
    %253 = vmatpush2.bf16.msra.mxu0 0
    %254 = vmatprep.subr.bf16.mxu0 0
    %255 = vmatpush2.bf16.msra.mxu0 0
    %256 = vmatprep.subr.bf16.mxu0 0
    %257 = vmatpush2.bf16.msra.mxu0 0
    %258 = vmatprep.subr.bf16.mxu0 0
    %259 = vmatpush2.bf16.msra.mxu0 0
    %260 = vmatprep.subr.bf16.mxu0 0
    %261 = vmatpush2.bf16.msra.mxu0 0
    %262 = vmatprep.mubr.bf16.mxu0 0
    %263 = vmatmul.mubr.bf16.gmra.mxu0 %v224
    %v264 = vpop.f32.mrf.mxu0
    %v265 = vadd.f32 %v204, %v264
    %v266 = vpop.f32.mrf.mxu0
    %v267 = vpop.f32.mrf.mxu0
    %v268 = vpop.f32.mrf.mxu0
    %269 = vdwg.mxu0
    %v270 = vmax.f32 %v265, 0.0
    %v271 = vpack.c.bf16 %v270, %v270
    %272 = vxpose.xlu0.c.b16.start [1/8] %v84, 128
    %273 = vxpose.xlu0.c.b16.cont [2/8] 0, 128
    %274 = vxpose.xlu0.c.b16.cont [3/8] 0, 128
    %275 = vxpose.xlu0.c.b16.cont [4/8] 0, 128
    %276 = vxpose.xlu0.c.b16.cont [5/8] 0, 128
    %277 = vxpose.xlu0.c.b16.cont [6/8] 0, 128
    %278 = vxpose.xlu0.c.b16.cont [7/8] 0, 128
    %279 = vxpose.xlu0.c.b16.end [8/8] 0, 128
    %v280 = vpop.trf.xlu0
    %v281 = vpop.trf.xlu0
    %v282 = vpop.trf.xlu0
    %v283 = vpop.trf.xlu0
    %v284 = vpop.trf.xlu0
    %v285 = vpop.trf.xlu0
    %v286 = vpop.trf.xlu0
    %v287 = vpop.trf.xlu0
    %v289 = vrot.slane %v198, 4
    %v291 = vsel %vm222, %v280, 0
    %v294 = vsel %vm226, %v289, 0
    %296 = vmatprep.subr.bf16.mxu0 0
    %297 = vmatpush1.bf16.msra.mxu0 0
    %298 = vmatprep.subr.bf16.mxu0 0
    %299 = vmatpush1.bf16.msra.mxu0 0
    %300 = vmatprep.subr.bf16.mxu0 0
    %301 = vmatpush1.bf16.msra.mxu0 0
    %302 = vmatprep.subr.bf16.mxu0 0
    %303 = vmatpush1.bf16.msra.mxu0 0
    %304 = vmatprep.subr.bf16.mxu0 0
    %305 = vmatpush1.bf16.msra.mxu0 0
    %306 = vmatprep.subr.bf16.mxu0 0
    %307 = vmatpush1.bf16.msra.mxu0 0
    %308 = vmatprep.subr.bf16.mxu0 0
    %309 = vmatpush1.bf16.msra.mxu0 0
    %310 = vmatprep.subr.bf16.mxu0 0
    %311 = vmatpush1.bf16.msra.mxu0 %v294
    %312 = vmatprep.subr.bf16.mxu0 0
    %313 = vmatpush2.bf16.msra.mxu0 0
    %314 = vmatprep.subr.bf16.mxu0 0
    %315 = vmatpush2.bf16.msra.mxu0 0
    %316 = vmatprep.subr.bf16.mxu0 0
    %317 = vmatpush2.bf16.msra.mxu0 0
    %318 = vmatprep.subr.bf16.mxu0 0
    %319 = vmatpush2.bf16.msra.mxu0 0
    %320 = vmatprep.subr.bf16.mxu0 0
    %321 = vmatpush2.bf16.msra.mxu0 0
    %322 = vmatprep.subr.bf16.mxu0 0
    %323 = vmatpush2.bf16.msra.mxu0 0
    %324 = vmatprep.subr.bf16.mxu0 0
    %325 = vmatpush2.bf16.msra.mxu0 0
    %326 = vmatprep.subr.bf16.mxu0 0
    %327 = vmatpush2.bf16.msra.mxu0 0
    %328 = vmatprep.mubr.bf16.mxu0 0
    %329 = vmatmul.mubr.bf16.gmra.mxu0 %v291
    %v330 = vpop.f32.mrf.mxu0
    %v331 = vadd.f32 %v204, %v330
    %v332 = vpop.f32.mrf.mxu0
    %v333 = vpop.f32.mrf.mxu0
    %v334 = vpop.f32.mrf.mxu0
    %335 = vdwg.mxu0
    %v336 = vmax.f32 %v331, 0.0
    %v337 = vpack.c.bf16 %v336, %v336
    %v339 = vrot.slane %v337, 4
    %v342 = vsel %vm226, %v271, %v339
    %v344 = vld [vmem:[#allocation8] sm:$0xf]
    %v345 = vld [vmem:[#allocation8 + $0x4] sm:$0xf]
    %v346 = vld [vmem:[#allocation8 + $0x8] sm:$0xf]
    %v347 = vld [vmem:[#allocation8 + $0xc] sm:$0xf]
    %v348 = vld [vmem:[#allocation8 + $0x10] sm:$0xf]
    %v349 = vld [vmem:[#allocation8 + $0x14] sm:$0xf]
    %v350 = vld [vmem:[#allocation8 + $0x18] sm:$0xf]
    %v351 = vld [vmem:[#allocation8 + $0x1c] sm:$0xf]
    %v352 = vld [vmem:[#allocation8 + $0x20] sm:$0xf]
    %v353 = vld [vmem:[#allocation8 + $0x24] sm:$0xf]
    %v354 = vld [vmem:[#allocation8 + $0x28] sm:$0xf]
    %v355 = vld [vmem:[#allocation8 + $0x2c] sm:$0xf]
    %v356 = vld [vmem:[#allocation8 + $0x30] sm:$0xf]
    %v357 = vld [vmem:[#allocation8 + $0x34] sm:$0xf]
    %v358 = vld [vmem:[#allocation8 + $0x38] sm:$0xf]
    %v359 = vld [vmem:[#allocation8 + $0x3c] sm:$0xf]
    %v376 = vunpack.c.l.b16 %v344
    %v377 = vunpack.c.l.b16 %v345
    %v378 = vunpack.c.l.b16 %v346
    %v379 = vunpack.c.l.b16 %v347
    %v380 = vunpack.c.l.b16 %v348
    %v381 = vunpack.c.l.b16 %v349
    %v382 = vunpack.c.l.b16 %v350
    %v383 = vunpack.c.l.b16 %v351
    %v384 = vunpack.c.l.b16 %v352
    %v385 = vunpack.c.l.b16 %v353
    %v386 = vunpack.c.l.b16 %v354
    %v387 = vunpack.c.l.b16 %v355
    %v388 = vunpack.c.l.b16 %v356
    %v389 = vunpack.c.l.b16 %v357
    %v390 = vunpack.c.l.b16 %v358
    %v391 = vunpack.c.l.b16 %v359
    %v392 = vpack.c.b16 %v377, %v376
    %v393 = vpack.c.b16 %v379, %v378
    %v394 = vpack.c.b16 %v381, %v380
    %v395 = vpack.c.b16 %v383, %v382
    %v396 = vpack.c.b16 %v385, %v384
    %v397 = vpack.c.b16 %v387, %v386
    %v398 = vpack.c.b16 %v389, %v388
    %v399 = vpack.c.b16 %v391, %v390
    %408 = vmatprep.subr.bf16.mxu0 0
    %409 = vmatpush1.bf16.msra.mxu0 %v399
    %410 = vmatprep.subr.bf16.mxu0 0
    %411 = vmatpush1.bf16.msra.mxu0 %v398
    %412 = vmatprep.subr.bf16.mxu0 0
    %413 = vmatpush1.bf16.msra.mxu0 %v397
    %414 = vmatprep.subr.bf16.mxu0 0
    %415 = vmatpush1.bf16.msra.mxu0 %v396
    %416 = vmatprep.subr.bf16.mxu0 0
    %417 = vmatpush1.bf16.msra.mxu0 %v395
    %418 = vmatprep.subr.bf16.mxu0 0
    %419 = vmatpush1.bf16.msra.mxu0 %v394
    %420 = vmatprep.subr.bf16.mxu0 0
    %421 = vmatpush1.bf16.msra.mxu0 %v393
    %422 = vmatprep.subr.bf16.mxu0 0
    %423 = vmatpush1.bf16.msra.mxu0 %v392
    %424 = vmatprep.subr.bf16.mxu0 0
    %425 = vmatpush2.bf16.msra.mxu0 0
    %426 = vmatprep.subr.bf16.mxu0 0
    %427 = vmatpush2.bf16.msra.mxu0 0
    %428 = vmatprep.subr.bf16.mxu0 0
    %429 = vmatpush2.bf16.msra.mxu0 0
    %430 = vmatprep.subr.bf16.mxu0 0
    %431 = vmatpush2.bf16.msra.mxu0 0
    %432 = vmatprep.subr.bf16.mxu0 0
    %433 = vmatpush2.bf16.msra.mxu0 0
    %434 = vmatprep.subr.bf16.mxu0 0
    %435 = vmatpush2.bf16.msra.mxu0 0
    %436 = vmatprep.subr.bf16.mxu0 0
    %437 = vmatpush2.bf16.msra.mxu0 0
    %438 = vmatprep.subr.bf16.mxu0 0
    %439 = vmatpush2.bf16.msra.mxu0 0
    %440 = vmatprep.mubr.bf16.mxu0 0
    %441 = vmatmul.mubr.bf16.gmra.mxu0 %v342
    %v442 = vpop.f32.mrf.mxu0
    %v443 = vadd.f32 0.0, %v442
    %v444 = vpop.f32.mrf.mxu0
    %v445 = vpop.f32.mrf.mxu0
    %v446 = vadd.f32 0.0, %v445
    %v447 = vpop.f32.mrf.mxu0
    %448 = vdwg.mxu0
    %v449 = vpack.c.bf16 %v446, %v443
    %v450 = vld [vmem:[%s5] sm:$0x1]
    %v452 = vlaneseq
    %v453 = vshrl.u32 %v452, 7
    %v454 = vsub.s32 0, %v453
    %v455 = vrot.slane %v450, %v454
    %v458 = vsel %vm226, %v449, 0
    %460 = vmatprep.subr.bf16.mxu0 0
    %461 = vmatpush1.bf16.msra.mxu0 0
    %462 = vmatprep.subr.bf16.mxu0 0
    %463 = vmatpush1.bf16.msra.mxu0 0
    %464 = vmatprep.subr.bf16.mxu0 0
    %465 = vmatpush1.bf16.msra.mxu0 0
    %466 = vmatprep.subr.bf16.mxu0 0
    %467 = vmatpush1.bf16.msra.mxu0 0
    %468 = vmatprep.subr.bf16.mxu0 0
    %469 = vmatpush1.bf16.msra.mxu0 0
    %470 = vmatprep.subr.bf16.mxu0 0
    %471 = vmatpush1.bf16.msra.mxu0 0
    %472 = vmatprep.subr.bf16.mxu0 0
    %473 = vmatpush1.bf16.msra.mxu0 0
    %474 = vmatprep.subr.bf16.mxu0 0
    %475 = vmatpush1.bf16.msra.mxu0 %v458
    %476 = vmatprep.subr.bf16.mxu0 0
    %477 = vmatpush2.bf16.msra.mxu0 0
    %478 = vmatprep.subr.bf16.mxu0 0
    %479 = vmatpush2.bf16.msra.mxu0 0
    %480 = vmatprep.subr.bf16.mxu0 0
    %481 = vmatpush2.bf16.msra.mxu0 0
    %482 = vmatprep.subr.bf16.mxu0 0
    %483 = vmatpush2.bf16.msra.mxu0 0
    %484 = vmatprep.subr.bf16.mxu0 0
    %485 = vmatpush2.bf16.msra.mxu0 0
    %486 = vmatprep.subr.bf16.mxu0 0
    %487 = vmatpush2.bf16.msra.mxu0 0
    %488 = vmatprep.subr.bf16.mxu0 0
    %489 = vmatpush2.bf16.msra.mxu0 0
    %490 = vmatprep.subr.bf16.mxu0 0
    %491 = vmatpush2.bf16.msra.mxu0 0
    %492 = vmatprep.mubr.bf16.mxu0 0
    %493 = vmatmul.mubr.bf16.gmra.mxu0 %v224
    %v494 = vpop.f32.mrf.mxu0
    %v495 = vadd.f32 %v455, %v494
    %v496 = vpop.f32.mrf.mxu0
    %v497 = vpop.f32.mrf.mxu0
    %v498 = vpop.f32.mrf.mxu0
    %499 = vdwg.mxu0
    %500 = vst [vmem:[#allocation10] sm:$0xff] %v495
    %v501 = vld [vmem:[%s5] sm:$0x1]
    %v503 = vlaneseq
    %v504 = vshrl.u32 %v503, 7
    %v505 = vsub.s32 0, %v504
    %v506 = vrot.slane %v501, %v505
    %v509 = vrot.slane %v449, 4
    %v511 = vsel %vm226, %v509, 0
    %513 = vmatprep.subr.bf16.mxu0 0
    %514 = vmatpush1.bf16.msra.mxu0 0
    %515 = vmatprep.subr.bf16.mxu0 0
    %516 = vmatpush1.bf16.msra.mxu0 0
    %517 = vmatprep.subr.bf16.mxu0 0
    %518 = vmatpush1.bf16.msra.mxu0 0
    %519 = vmatprep.subr.bf16.mxu0 0
    %520 = vmatpush1.bf16.msra.mxu0 0
    %521 = vmatprep.subr.bf16.mxu0 0
    %522 = vmatpush1.bf16.msra.mxu0 0
    %523 = vmatprep.subr.bf16.mxu0 0
    %524 = vmatpush1.bf16.msra.mxu0 0
    %525 = vmatprep.subr.bf16.mxu0 0
    %526 = vmatpush1.bf16.msra.mxu0 0
    %527 = vmatprep.subr.bf16.mxu0 0
    %528 = vmatpush1.bf16.msra.mxu0 %v511
    %529 = vmatprep.subr.bf16.mxu0 0
    %530 = vmatpush2.bf16.msra.mxu0 0
    %531 = vmatprep.subr.bf16.mxu0 0
    %532 = vmatpush2.bf16.msra.mxu0 0
    %533 = vmatprep.subr.bf16.mxu0 0
    %534 = vmatpush2.bf16.msra.mxu0 0
    %535 = vmatprep.subr.bf16.mxu0 0
    %536 = vmatpush2.bf16.msra.mxu0 0
    %537 = vmatprep.subr.bf16.mxu0 0
    %538 = vmatpush2.bf16.msra.mxu0 0
    %539 = vmatprep.subr.bf16.mxu0 0
    %540 = vmatpush2.bf16.msra.mxu0 0
    %541 = vmatprep.subr.bf16.mxu0 0
    %542 = vmatpush2.bf16.msra.mxu0 0
    %543 = vmatprep.subr.bf16.mxu0 0
    %544 = vmatpush2.bf16.msra.mxu0 0
    %545 = vmatprep.mubr.bf16.mxu0 0
    %546 = vmatmul.mubr.bf16.gmra.mxu0 %v291
    %v547 = vpop.f32.mrf.mxu0
    %v548 = vadd.f32 %v506, %v547
    %v549 = vpop.f32.mrf.mxu0
    %v550 = vpop.f32.mrf.mxu0
    %v551 = vpop.f32.mrf.mxu0
    %552 = vdwg.mxu0
    %s553 = scalar_lea.vmem [#allocation10], 8
    %554 = vst [vmem:[%s553] sm:$0xff] %v548
    // Predicated region
    $region42: #{tpu_custom_call.1} parent=1 // pred_check
      _
    $region43: #{tpu_custom_call.1} parent=1 // pred_check_branch
      %556 = sbr.rel (0) target = $region45
    $region44: #{tpu_custom_call.1} parent=1 // pred_region
      %s558 = ssub.s32 256, 256
      %559 = vsyncadd [#allocation4], %s558
      %s560 = sshll.u32 [#allocation10], 4
      %s561 = int_to_ptr.vmem [resolvable:$true] %s560
      %566 = dma.vmem_to_hbm [thread:$0]  %s561, 256, %s6, [#allocation4], 128, 128, 8
    $region45: #{tpu_custom_call.1} parent=1 // pred_fallthru
      _
    // Predicated region
    $region46: #{tpu_custom_call.1} parent=1 // pred_check
      _
    $region47: #{tpu_custom_call.1} parent=1 // pred_check_branch
      %568 = sbr.rel (0) target = $region49
    $region48: #{tpu_custom_call.1} parent=1 // pred_region
      %569 = dma.done [#allocation4], 256
    $region49: #{tpu_custom_call.1} parent=1 // pred_fallthru
      _
    %570 = vsyncpa [#allocation3], 1
    %571 = vsyncpa [#allocation6], 1
    %572 = vsyncpa [#allocation9], 1
    %573 = vsyncpa [#allocation4], 1

</llo_original>
